<compile_context>
chip_gen: v7x
topology: tpu7x:2x2x1
jax: 0.10.0
libtpu: 0.0.40
codegen_flags: <defaults>
</compile_context>

<pallas_src>
import functools

import jax
import jax.numpy as jnp
from jax.experimental import pallas as pl
from jax.experimental.pallas import tpu as pltpu


def _cam_kernel(x_ref, w1_ref, b1_ref, w2_ref, b2_ref, o_ref,
                sum_ref, max_ref, *, inv_hw, hw_total, hw_tile, ragged):
    # x_ref : (1, C, hw_tile)  current (batch, spatial-tile) block
    # w1_ref: (mid, C)   b1_ref: (mid, 1)
    # w2_ref: (C, mid)   b2_ref: (C, 1)
    # o_ref : (1, C, 1)  per-channel attention for this batch element
    # sum_ref / max_ref: (C, 1) f32 accumulators (persist across the HW axis)
    h = pl.program_id(1)
    nh = pl.num_programs(1)

    @pl.when(h == 0)
    def _():
        sum_ref[...] = jnp.zeros_like(sum_ref)
        max_ref[...] = jnp.full_like(max_ref, -jnp.inf)

    x = x_ref[0]                                        # (C, hw_tile), input dtype
    if ragged:
        # Last tile overhangs the array; padding contents are unspecified.
        pos = h * hw_tile + jax.lax.broadcasted_iota(jnp.int32, x.shape, 1)
        valid = pos < hw_total
        x_sum = jnp.where(valid, x, jnp.zeros_like(x))
        x_max = jnp.where(valid, x, jnp.full_like(x, -jnp.inf))
    else:
        x_sum = x
        x_max = x

    # No full-tile f32 materialization: accumulate the sum in f32, take the
    # max in the input dtype and cast only the (C, 1) result.
    sum_ref[...] += jnp.sum(x_sum, axis=-1, keepdims=True, dtype=jnp.float32)
    tile_max = jnp.max(x_max, axis=-1, keepdims=True).astype(jnp.float32)
    max_ref[...] = jnp.maximum(max_ref[...], tile_max)

    @pl.when(h == nh - 1)
    def _():
        avg = sum_ref[...] * inv_hw                     # (C, 1) f32
        mx = max_ref[...]                               # (C, 1) f32
        pooled = jnp.concatenate([avg, mx], axis=1)     # (C, 2): one batched MLP
        w1 = w1_ref[...].astype(jnp.float32)
        b1 = b1_ref[...].astype(jnp.float32)
        w2 = w2_ref[...].astype(jnp.float32)
        b2 = b2_ref[...].astype(jnp.float32)

        hid = jnp.maximum(
            jnp.dot(w1, pooled, preferred_element_type=jnp.float32) + b1, 0.0)
        out2 = jnp.dot(w2, hid, preferred_element_type=jnp.float32) + b2  # (C, 2)
        att = jax.nn.sigmoid(out2[:, 0:1] + out2[:, 1:2])                 # (C, 1)
        o_ref[0] = att.astype(o_ref.dtype)


def _vmem_capacity_bytes():
    """Physical VMEM of the current generation; conservative fallback = 64 MiB."""
    try:
        return int(pltpu.get_tpu_info().vmem_capacity_bytes)
    except Exception:
        return 64 << 20


def _pick_hw_tile(hw, c, itemsize, x_budget_bytes, max_hw_tile=None):
    """Pick the HW (lane) tile from a VMEM budget for the double-buffered x block.

    Returns (hw_tile, nh, ragged)."""
    max_tile = max(int(x_budget_bytes) // (2 * c * itemsize), 128)
    if max_hw_tile is not None:
        max_tile = min(max_tile, int(max_hw_tile))
    if hw <= max_tile:
        # Single full-extent block per batch element (exempt from (8,128) rule).
        return hw, 1, False
    tile = max(128, (max_tile // 128) * 128)            # lane-aligned
    nh = -(-hw // tile)                                 # ceil div
    return tile, nh, (hw % tile) != 0


@functools.partial(jax.jit, static_argnames=("max_hw_tile",))
def channel_attention(x, w1, b1, w2, b2, *, max_hw_tile=None):
    """x: (N, C, H, W); w1: (mid, C); b1: (mid,); w2: (C, mid); b2: (C,).
    Returns the (N, C, 1, 1) channel-attention map sigmoid(MLP(avg)+MLP(max))."""
    N, C, H, W = x.shape
    mid = w1.shape[0]
    HW = H * W

    itemsize = jnp.dtype(x.dtype).itemsize
    vmem_cap = _vmem_capacity_bytes()
    # ~3/8 of physical VMEM for the double-buffered x block:
    # ~48 MiB on v5e/v6e (128 MiB), ~24 MiB on v7x (64 MiB).
    x_budget = vmem_cap * 3 // 8
    hw_tile, nh, ragged = _pick_hw_tile(HW, C, itemsize, x_budget, max_hw_tile)

    # Free reshape: NCHW -> (N, C, H*W), channels on sublanes, spatial on lanes.
    x3 = x.reshape(N, C, HW)
    b1c = b1.reshape(mid, 1)
    b2c = b2.reshape(C, 1)

    # Explicit VMEM budget: double-buffered input block + margin for weights /
    # output / scratch, capped below the generation's physical VMEM.
    block_bytes = C * hw_tile * itemsize
    vmem_limit = int(min(max(2 * block_bytes + (2 << 20), 4 << 20),
                         vmem_cap * 7 // 8))

    kernel = functools.partial(_cam_kernel, inv_hw=1.0 / float(HW),
                               hw_total=HW, hw_tile=hw_tile, ragged=ragged)

    # TODO(synk): for N == 1 on v7x (2 TensorCores) split the HW reduction
    # across cores (parallel leading axis + partial (sum, max) outputs and a
    # tiny combine) so both cores stream HBM; single-core path is used here.
    att = pl.pallas_call(
        kernel,
        out_shape=jax.ShapeDtypeStruct((N, C, 1), x.dtype),
        grid=(N, nh),
        in_specs=[
            pl.BlockSpec((1, C, hw_tile), lambda n, h: (n, 0, h)),
            pl.BlockSpec((mid, C), lambda n, h: (0, 0)),
            pl.BlockSpec((mid, 1), lambda n, h: (0, 0)),
            pl.BlockSpec((C, mid), lambda n, h: (0, 0)),
            pl.BlockSpec((C, 1), lambda n, h: (0, 0)),
        ],
        out_specs=pl.BlockSpec((1, C, 1), lambda n, h: (n, 0, 0)),
        scratch_shapes=[pltpu.VMEM((C, 1), jnp.float32),
                        pltpu.VMEM((C, 1), jnp.float32)],
        compiler_params=pltpu.CompilerParams(
            dimension_semantics=("parallel", "arbitrary"),
            vmem_limit_bytes=vmem_limit),
    )(x3, w1, b1c, w2, b2c)

    return att.reshape(N, C, 1, 1)


def _reference(x, w1, b1, w2, b2):
    """Pure-JAX reference mirroring the PyTorch forward."""
    avg = jnp.mean(x, axis=(2, 3))                      # (N, C)
    mx = jnp.max(x, axis=(2, 3))                        # (N, C)

    def mlp(p):
        return jnp.maximum(p @ w1.T + b1, 0.0) @ w2.T + b2

    att = jax.nn.sigmoid(mlp(avg) + mlp(mx))            # (N, C)
    return att[:, :, None, None]


if __name__ == "__main__":
    key = jax.random.PRNGKey(0)
    N, C = 2, 64
    reduction = 16                                      # module default
    mid = C // reduction

    k_x, k_w1, k_b1, k_w2, k_b2, k_x2 = jax.random.split(key, 6)
    # nn.Linear weights are (out_features, in_features).
    w1 = jax.random.normal(k_w1, (mid, C), dtype=jnp.float32) * 0.1
    b1 = jax.random.normal(k_b1, (mid,), dtype=jnp.float32) * 0.1
    w2 = jax.random.normal(k_w2, (C, mid), dtype=jnp.float32) * 0.1
    b2 = jax.random.normal(k_b2, (C,), dtype=jnp.float32) * 0.1

    # Case 1: H*W fits in a single block (nh == 1, no masking).
    x = jax.random.normal(k_x, (N, C, 16, 16), dtype=jnp.float32)
    out = jax.block_until_ready(channel_attention(x, w1, b1, w2, b2))
    ref = _reference(x, w1, b1, w2, b2)
    assert out.shape == (N, C, 1, 1)
    assert jnp.allclose(out, ref, rtol=1e-5, atol=1e-5), (
        float(jnp.max(jnp.abs(out - ref))))

    # Case 2: ragged HW tiling (400 = 3*128 + 16) exercising the lane mask.
    x2 = jax.random.normal(k_x2, (N, C, 20, 20), dtype=jnp.float32)
    out2 = jax.block_until_ready(
        channel_attention(x2, w1, b1, w2, b2, max_hw_tile=128))
    ref2 = _reference(x2, w1, b1, w2, b2)
    assert out2.shape == (N, C, 1, 1)
    assert jnp.allclose(out2, ref2, rtol=1e-5, atol=1e-5), (
        float(jnp.max(jnp.abs(out2 - ref2))))

    print("KERNEL_OK")
</pallas_src>

<mosaic_0001>
module attributes {stable_mosaic.version = 11 : i64} {
  func.func @_cam_kernel(%arg0: i32, %arg1: i32, %arg2: memref<1x64x256xf32, #tpu.memory_space<vmem>>, %arg3: memref<4x64xf32, #tpu.memory_space<vmem>>, %arg4: memref<4x1xf32, #tpu.memory_space<vmem>>, %arg5: memref<64x4xf32, #tpu.memory_space<vmem>>, %arg6: memref<64x1xf32, #tpu.memory_space<vmem>>, %arg7: memref<1x64x1xf32, #tpu.memory_space<vmem>>, %arg8: memref<64x1xf32, #tpu.memory_space<vmem>>, %arg9: memref<64x1xf32, #tpu.memory_space<vmem>>) attributes {dimension_semantics = [#tpu.dimension_semantics<parallel>, #tpu.dimension_semantics<arbitrary>], iteration_bounds = array<i64: 2, 1>, scalar_prefetch = 0 : i64, scratch_operands = 2 : i64, tpu.core_type = #tpu.core_type<tc>, window_params = [{transform_indices = @transform_0, window_bounds = array<i64: 1, 64, 256>}, {pipeline_mode = #tpu.pipeline_mode<synchronous>, transform_indices = @transform_1, window_bounds = array<i64: 4, 64>}, {pipeline_mode = #tpu.pipeline_mode<synchronous>, transform_indices = @transform_2, window_bounds = array<i64: 4, 1>}, {pipeline_mode = #tpu.pipeline_mode<synchronous>, transform_indices = @transform_3, window_bounds = array<i64: 64, 4>}, {pipeline_mode = #tpu.pipeline_mode<synchronous>, transform_indices = @transform_4, window_bounds = array<i64: 64, 1>}, {transform_indices = @transform_5, window_bounds = array<i64: 1, 64, 1>}]} {
    %c0_i32 = arith.constant 0 : i32
    %0 = arith.cmpi eq, %arg1, %c0_i32 : i32
    %1 = arith.extui %0 : i1 to i32
    %c0_i32_0 = arith.constant 0 : i32
    %2 = arith.cmpi ne, %1, %c0_i32_0 : i32
    scf.if %2 {
      %cst_14 = arith.constant 0.000000e+00 : f32
      %18 = vector.broadcast %cst_14 : f32 to vector<64x1xf32>
      %c0_15 = arith.constant 0 : index
      %c0_16 = arith.constant 0 : index
      %19 = vector.load %arg8[%c0_15, %c0_16] : memref<64x1xf32, #tpu.memory_space<vmem>>, vector<64x1xf32>
      tpu.vector_store %arg8[%c0_15, %c0_16], %18 {strides = array<i32>} : memref<64x1xf32, #tpu.memory_space<vmem>>, vector<64x1xf32>,
      %cst_17 = arith.constant 0xFF800000 : f32
      %20 = vector.broadcast %cst_17 : f32 to vector<64x1xf32>
      %c0_18 = arith.constant 0 : index
      %c0_19 = arith.constant 0 : index
      %21 = vector.load %arg9[%c0_18, %c0_19] : memref<64x1xf32, #tpu.memory_space<vmem>>, vector<64x1xf32>
      tpu.vector_store %arg9[%c0_18, %c0_19], %20 {strides = array<i32>} : memref<64x1xf32, #tpu.memory_space<vmem>>, vector<64x1xf32>,
    } else {
    }
    %c0 = arith.constant 0 : index
    %c0_1 = arith.constant 0 : index
    %c0_2 = arith.constant 0 : index
    %3 = vector.load %arg2[%c0, %c0_1, %c0_2] : memref<1x64x256xf32, #tpu.memory_space<vmem>>, vector<1x64x256xf32>
    %4 = vector.shape_cast %3 : vector<1x64x256xf32> to vector<64x256xf32>
    %c0_3 = arith.constant 0 : index
    %c0_4 = arith.constant 0 : index
    %5 = vector.load %arg8[%c0_3, %c0_4] : memref<64x1xf32, #tpu.memory_space<vmem>>, vector<64x1xf32>
    %cst = arith.constant dense<0.000000e+00> : vector<64xf32>
    %6 = vector.multi_reduction <add>, %4, %cst [1] : vector<64x256xf32> to vector<64xf32>
    %7 = vector.shape_cast %6 : vector<64xf32> to vector<64x1xf32>
    %8 = arith.addf %5, %7 : vector<64x1xf32>
    %c0_5 = arith.constant 0 : index
    %c0_6 = arith.constant 0 : index
    %9 = vector.load %arg8[%c0_5, %c0_6] : memref<64x1xf32, #tpu.memory_space<vmem>>, vector<64x1xf32>
    tpu.vector_store %arg8[%c0_5, %c0_6], %8 {strides = array<i32>} : memref<64x1xf32, #tpu.memory_space<vmem>>, vector<64x1xf32>,
    %cst_7 = arith.constant dense<0xFF800000> : vector<64xf32>
    %10 = vector.multi_reduction <maximumf>, %4, %cst_7 [1] : vector<64x256xf32> to vector<64xf32>
    %11 = vector.shape_cast %10 : vector<64xf32> to vector<64x1xf32>
    %c0_8 = arith.constant 0 : index
    %c0_9 = arith.constant 0 : index
    %12 = vector.load %arg9[%c0_8, %c0_9] : memref<64x1xf32, #tpu.memory_space<vmem>>, vector<64x1xf32>
    %13 = arith.maximumf %12, %11 : vector<64x1xf32>
    %c0_10 = arith.constant 0 : index
    %c0_11 = arith.constant 0 : index
    %14 = vector.load %arg9[%c0_10, %c0_11] : memref<64x1xf32, #tpu.memory_space<vmem>>, vector<64x1xf32>
    tpu.vector_store %arg9[%c0_10, %c0_11], %13 {strides = array<i32>} : memref<64x1xf32, #tpu.memory_space<vmem>>, vector<64x1xf32>,
    %c0_i32_12 = arith.constant 0 : i32
    %15 = arith.cmpi eq, %arg1, %c0_i32_12 : i32
    %16 = arith.extui %15 : i1 to i32
    %c0_i32_13 = arith.constant 0 : i32
    %17 = arith.cmpi ne, %16, %c0_i32_13 : i32
    scf.if %17 {
      %c0_14 = arith.constant 0 : index
      %c0_15 = arith.constant 0 : index
      %18 = vector.load %arg8[%c0_14, %c0_15] : memref<64x1xf32, #tpu.memory_space<vmem>>, vector<64x1xf32>
      %cst_16 = arith.constant 3.906250e-03 : f32
      %19 = vector.broadcast %cst_16 : f32 to vector<64x1xf32>
      %20 = arith.mulf %18, %19 : vector<64x1xf32>
      %c0_17 = arith.constant 0 : index
      %c0_18 = arith.constant 0 : index
      %21 = vector.load %arg9[%c0_17, %c0_18] : memref<64x1xf32, #tpu.memory_space<vmem>>, vector<64x1xf32>
      %22 = tpu.concatenate %20, %21 in 1 : vector<64x1xf32>, vector<64x1xf32> -> vector<64x2xf32>
      %c0_19 = arith.constant 0 : index
      %c0_20 = arith.constant 0 : index
      %23 = vector.load %arg3[%c0_19, %c0_20] : memref<4x64xf32, #tpu.memory_space<vmem>>, vector<4x64xf32>
      %c0_21 = arith.constant 0 : index
      %c0_22 = arith.constant 0 : index
      %24 = vector.load %arg4[%c0_21, %c0_22] : memref<4x1xf32, #tpu.memory_space<vmem>>, vector<4x1xf32>
      %c0_23 = arith.constant 0 : index
      %c0_24 = arith.constant 0 : index
      %25 = vector.load %arg5[%c0_23, %c0_24] : memref<64x4xf32, #tpu.memory_space<vmem>>, vector<64x4xf32>
      %c0_25 = arith.constant 0 : index
      %c0_26 = arith.constant 0 : index
      %26 = vector.load %arg6[%c0_25, %c0_26] : memref<64x1xf32, #tpu.memory_space<vmem>>, vector<64x1xf32>
      %cst_27 = arith.constant dense<0.000000e+00> : vector<4x2xf32>
      %27 = tpu.matmul %23, %22, %cst_27 {dimension_numbers = #tpu.dot_dimension_numbers<[1], [0], [0], [1], [0, 0, 1, 1], [], []>} : vector<4x64xf32>, vector<64x2xf32>, vector<4x2xf32> -> vector<4x2xf32>
      %28 = vector.broadcast %24 : vector<4x1xf32> to vector<4x2xf32>
      %29 = arith.addf %27, %28 : vector<4x2xf32>
      %cst_28 = arith.constant 0.000000e+00 : f32
      %30 = vector.broadcast %cst_28 : f32 to vector<4x2xf32>
      %31 = arith.maximumf %29, %30 : vector<4x2xf32>
      %cst_29 = arith.constant dense<0.000000e+00> : vector<64x2xf32>
      %32 = tpu.matmul %25, %31, %cst_29 {dimension_numbers = #tpu.dot_dimension_numbers<[1], [0], [0], [1], [0, 0, 1, 1], [], []>} : vector<64x4xf32>, vector<4x2xf32>, vector<64x2xf32> -> vector<64x2xf32>
      %33 = vector.broadcast %26 : vector<64x1xf32> to vector<64x2xf32>
      %34 = arith.addf %32, %33 : vector<64x2xf32>
      %35 = vector.extract_strided_slice %34 {offsets = [0, 0], sizes = [64, 1], strides = [1, 1]} : vector<64x2xf32> to vector<64x1xf32>
      %36 = vector.extract_strided_slice %34 {offsets = [0, 1], sizes = [64, 1], strides = [1, 1]} : vector<64x2xf32> to vector<64x1xf32>
      %37 = arith.addf %35, %36 : vector<64x1xf32>
      %38 = arith.negf %37 : vector<64x1xf32>
      %39 = math.exp %38 : vector<64x1xf32>
      %cst_30 = arith.constant 1.000000e+00 : f32
      %40 = vector.broadcast %cst_30 : f32 to vector<64x1xf32>
      %41 = arith.addf %40, %39 : vector<64x1xf32>
      %42 = arith.divf %40, %41 : vector<64x1xf32>
      %c0_31 = arith.constant 0 : index
      %c0_32 = arith.constant 0 : index
      %c0_33 = arith.constant 0 : index
      %43 = vector.load %arg7[%c0_31, %c0_32, %c0_33] : memref<1x64x1xf32, #tpu.memory_space<vmem>>, vector<1x64x1xf32>
      %44 = vector.shape_cast %43 : vector<1x64x1xf32> to vector<64x1xf32>
      %45 = vector.shape_cast %42 : vector<64x1xf32> to vector<1x64x1xf32>
      tpu.vector_store %arg7[%c0_31, %c0_32, %c0_33], %45 {strides = array<i32>} : memref<1x64x1xf32, #tpu.memory_space<vmem>>, vector<1x64x1xf32>,
    } else {
    }
    return
  }
  func.func @transform_0(%arg0: i32, %arg1: i32) -> (i32, i32, i32) {
    %c0_i32 = arith.constant 0 : i32
    %c0_i32_0 = arith.constant 0 : i32
    return %arg0, %c0_i32, %arg1 : i32, i32, i32
  }
  func.func @transform_1(%arg0: i32, %arg1: i32) -> (i32, i32) {
    %c0_i32 = arith.constant 0 : i32
    %c0_i32_0 = arith.constant 0 : i32
    %c0_i32_1 = arith.constant 0 : i32
    return %c0_i32, %c0_i32_0 : i32, i32
  }
  func.func @transform_2(%arg0: i32, %arg1: i32) -> (i32, i32) {
    %c0_i32 = arith.constant 0 : i32
    %c0_i32_0 = arith.constant 0 : i32
    %c0_i32_1 = arith.constant 0 : i32
    return %c0_i32, %c0_i32_0 : i32, i32
  }
  func.func @transform_3(%arg0: i32, %arg1: i32) -> (i32, i32) {
    %c0_i32 = arith.constant 0 : i32
    %c0_i32_0 = arith.constant 0 : i32
    %c0_i32_1 = arith.constant 0 : i32
    return %c0_i32, %c0_i32_0 : i32, i32
  }
  func.func @transform_4(%arg0: i32, %arg1: i32) -> (i32, i32) {
    %c0_i32 = arith.constant 0 : i32
    %c0_i32_0 = arith.constant 0 : i32
    %c0_i32_1 = arith.constant 0 : i32
    return %c0_i32, %c0_i32_0 : i32, i32
  }
  func.func @transform_5(%arg0: i32, %arg1: i32) -> (i32, i32, i32) {
    %c0_i32 = arith.constant 0 : i32
    %c0_i32_0 = arith.constant 0 : i32
    %c0_i32_1 = arith.constant 0 : i32
    return %arg0, %c0_i32, %c0_i32_0 : i32, i32, i32
  }
}

</mosaic_0001>

<llo_original>
// kernel: channel_attention.1
$region0: #{channel_attention.1}
  #allocation0 [shape = 'u32[]', space=smem, size = 0x4, offset = 0x4, fixed_abs, tag = 'smem constant byte address 0x4 - core index']
  #allocation1 [shape = 'u32[144,128]{1,0:T(1,128)}', space=vmem, size = 0x12000, scoped, tag = 'internal scratch']
  #allocation2 [shape = 'f32[64,1]{1,0:T(8,128)}', space=vmem, size = 0x8000, scoped, tag = 'scratch operand']
  #allocation3 [shape = 'f32[64,1]{1,0:T(8,128)}', space=vmem, size = 0x8000, scoped, tag = 'scratch operand']
  %s0 = inlined_call_operand.vmem [shape: f32[2,64,256], index: 0, kind: input, shape index: {}]
  %s1 = inlined_call_operand.vmem [shape: f32[4,64], index: 1, kind: input, shape index: {}]
  %s2 = inlined_call_operand.vmem [shape: f32[4,1], index: 2, kind: input, shape index: {}]
  %s3 = inlined_call_operand.vmem [shape: f32[64,4], index: 3, kind: input, shape index: {}]
  %s4 = inlined_call_operand.vmem [shape: f32[64,1], index: 4, kind: input, shape index: {}]
  %s5 = inlined_call_operand.vmem [shape: f32[2,64,1], index: 5, kind: output, shape index: {}]
  %s6 = sld [smem:[#allocation0]]
  $region61: #{channel_attention.1} parent=0
    _
  %s8 = ssub.s32 1, %s6
  %s9 = scalar_select 0, %s8, %s6
  loop: start=0, step=1, limit=4
  $region2: #{channel_attention.1} parent=0 // loop_pre_header
    _
  $region3: #{channel_attention.1} parent=0 // loop_header
    %s11 = sphi 0, %s15
    %p12 = scmp.ge.s32.totalorder %s11, 4
    %s18 = sphi 0, %s30
    %s19 = sphi 0, %s26
    %s20 = sphi 0, %s18
    %s21 = sphi 0, %s19
    %s22 = sphi 0, %s20
    %s23 = sphi 0, %s21
    %s35 = sphi 0, %s37
    %s38 = sphi 0, %s35
    %s39 = sphi 0, %s38
    %s55 = sphi 0, %s39
    %s59 = sphi 0, %s59
    %s61 = sphi 0, %s59
    %s62 = sphi 0, %s61
    %s76 = sphi 0, %s62
    %s80 = sphi 0, %s80
    %s82 = sphi 0, %s80
    %s83 = sphi 0, %s82
    %s97 = sphi 0, %s83
    %s101 = sphi 0, %s101
    %s103 = sphi 0, %s101
    %s104 = sphi 0, %s103
    %s118 = sphi 0, %s104
    %s122 = sphi 0, %s122
    %s124 = sphi 0, %s122
    %s125 = sphi 0, %s124
    %s139 = sphi 0, %s125
    %s145 = sphi 0, %s147
    %s148 = sphi 0, %s145
    %s149 = sphi 0, %s148
    %s165 = sphi 0, %s149
  $region4: #{channel_attention.1} parent=0 // loop_header_branch
    %14 = sbr.rel (%p12) target = $region8
  $region5: #{channel_attention.1} parent=0 // loop_body
    %s16 = ssub.s32 %s11, 1
    %s17 = ssub.s32 %s11, 2
    %s24 = sadd.s32 1, %s19
    %p25 = scmp.ge.s32.totalorder %s24, 1
    %s26 = scalar_select %p25, 0, %s24
    %s27 = sadd.s32 1, %s18
    %s28 = scalar_select %p25, %s27, %s18
    %p29 = scmp.ge.s32.totalorder %s28, 2
    %s30 = scalar_select %p29, 0, %s28
    %s31 = ssub.s32 %s18, %s30
    %s32 = ssub.s32 %s19, %s26
    %s33 = sor.u32 %s31, %s32
    %p34 = scmp.eq.s32.totalorder %s33, 0
    %s36 = sadd.s32 %s35, 1
    %s37 = scalar_select %p34, %s35, %s36
    %p40 = pneg %p34
    %p41 = scmp.eq.s32.totalorder %s11, 1
    %p42 = por %p40, %p41
    %p43 = scmp.ne.s32.totalorder %s35, %s38
    %p44 = scmp.eq.s32.totalorder %s11, 0
    %p45 = por %p43, %p44
    %p46 = scmp.ne.s32.totalorder %s35, %s38
    %p47 = scmp.eq.s32.totalorder %s16, 1
    %p48 = por %p46, %p47
    %p49 = scmp.ne.s32.totalorder %s38, %s39
    %p50 = scmp.eq.s32.totalorder %s16, 0
    %p51 = por %p49, %p50
    %p52 = scmp.ne.s32.totalorder %s38, %s39
    %p53 = scmp.eq.s32.totalorder %s17, 1
    %p54 = por %p52, %p53
    %p56 = scmp.ne.s32.totalorder %s39, %s55
    %p57 = scmp.eq.s32.totalorder %s17, 0
    %p58 = por %p56, %p57
    %s60 = sadd.s32 %s59, 1
    %p63 = scmp.eq.s32.totalorder %s11, 1
    %p64 = scmp.ne.s32.totalorder %s59, %s61
    %p65 = scmp.eq.s32.totalorder %s11, 0
    %p66 = por %p64, %p65
    %p67 = scmp.ne.s32.totalorder %s59, %s61
    %p68 = scmp.eq.s32.totalorder %s16, 1
    %p69 = por %p67, %p68
    %p70 = scmp.ne.s32.totalorder %s61, %s62
    %p71 = scmp.eq.s32.totalorder %s16, 0
    %p72 = por %p70, %p71
    %p73 = scmp.ne.s32.totalorder %s61, %s62
    %p74 = scmp.eq.s32.totalorder %s17, 1
    %p75 = por %p73, %p74
    %p77 = scmp.ne.s32.totalorder %s62, %s76
    %p78 = scmp.eq.s32.totalorder %s17, 0
    %p79 = por %p77, %p78
    %s81 = sadd.s32 %s80, 1
    %p84 = scmp.eq.s32.totalorder %s11, 1
    %p85 = scmp.ne.s32.totalorder %s80, %s82
    %p86 = scmp.eq.s32.totalorder %s11, 0
    %p87 = por %p85, %p86
    %p88 = scmp.ne.s32.totalorder %s80, %s82
    %p89 = scmp.eq.s32.totalorder %s16, 1
    %p90 = por %p88, %p89
    %p91 = scmp.ne.s32.totalorder %s82, %s83
    %p92 = scmp.eq.s32.totalorder %s16, 0
    %p93 = por %p91, %p92
    %p94 = scmp.ne.s32.totalorder %s82, %s83
    %p95 = scmp.eq.s32.totalorder %s17, 1
    %p96 = por %p94, %p95
    %p98 = scmp.ne.s32.totalorder %s83, %s97
    %p99 = scmp.eq.s32.totalorder %s17, 0
    %p100 = por %p98, %p99
    %s102 = sadd.s32 %s101, 1
    %p105 = scmp.eq.s32.totalorder %s11, 1
    %p106 = scmp.ne.s32.totalorder %s101, %s103
    %p107 = scmp.eq.s32.totalorder %s11, 0
    %p108 = por %p106, %p107
    %p109 = scmp.ne.s32.totalorder %s101, %s103
    %p110 = scmp.eq.s32.totalorder %s16, 1
    %p111 = por %p109, %p110
    %p112 = scmp.ne.s32.totalorder %s103, %s104
    %p113 = scmp.eq.s32.totalorder %s16, 0
    %p114 = por %p112, %p113
    %p115 = scmp.ne.s32.totalorder %s103, %s104
    %p116 = scmp.eq.s32.totalorder %s17, 1
    %p117 = por %p115, %p116
    %p119 = scmp.ne.s32.totalorder %s104, %s118
    %p120 = scmp.eq.s32.totalorder %s17, 0
    %p121 = por %p119, %p120
    %s123 = sadd.s32 %s122, 1
    %p126 = scmp.eq.s32.totalorder %s11, 1
    %p127 = scmp.ne.s32.totalorder %s122, %s124
    %p128 = scmp.eq.s32.totalorder %s11, 0
    %p129 = por %p127, %p128
    %p130 = scmp.ne.s32.totalorder %s122, %s124
    %p131 = scmp.eq.s32.totalorder %s16, 1
    %p132 = por %p130, %p131
    %p133 = scmp.ne.s32.totalorder %s124, %s125
    %p134 = scmp.eq.s32.totalorder %s16, 0
    %p135 = por %p133, %p134
    %p136 = scmp.ne.s32.totalorder %s124, %s125
    %p137 = scmp.eq.s32.totalorder %s17, 1
    %p138 = por %p136, %p137
    %p140 = scmp.ne.s32.totalorder %s125, %s139
    %p141 = scmp.eq.s32.totalorder %s17, 0
    %p142 = por %p140, %p141
    %s143 = ssub.s32 %s18, %s30
    %p144 = scmp.eq.s32.totalorder %s143, 0
    %s146 = sadd.s32 %s145, 1
    %s147 = scalar_select %p144, %s145, %s146
    %p150 = pneg %p144
    %p151 = scmp.eq.s32.totalorder %s11, 1
    %p152 = por %p150, %p151
    %p153 = scmp.ne.s32.totalorder %s145, %s148
    %p154 = scmp.eq.s32.totalorder %s11, 0
    %p155 = por %p153, %p154
    %p156 = scmp.ne.s32.totalorder %s145, %s148
    %p157 = scmp.eq.s32.totalorder %s16, 1
    %p158 = por %p156, %p157
    %p159 = scmp.ne.s32.totalorder %s148, %s149
    %p160 = scmp.eq.s32.totalorder %s16, 0
    %p161 = por %p159, %p160
    %p162 = scmp.ne.s32.totalorder %s148, %s149
    %p163 = scmp.eq.s32.totalorder %s17, 1
    %p164 = por %p162, %p163
    %p166 = scmp.ne.s32.totalorder %s149, %s165
    %p167 = scmp.eq.s32.totalorder %s17, 0
    %p168 = por %p166, %p167
    %p169 = scmp.le.s32.totalorder 1, %s11
    %p170 = scmp.lt.s32.totalorder %s11, 3
    %p171 = pnand %p169, %p170
    %p172 = pneg %p171
    // Predicated region
    $region9: #{channel_attention.1} parent=5 // pred_check
      _
    $region10: #{channel_attention.1} parent=5 // pred_check_branch
      %174 = sbr.rel (%p171) target = $region12
    $region11: #{channel_attention.1} parent=5 // pred_region
      %s175 = ssub.s32 %s11, 1
      // Predicated region
      $region13: #{channel_attention.1} parent=11 // pred_check
        %p176 = pneg %p72
      $region14: #{channel_attention.1} parent=11 // pred_check_branch
        %178 = sbr.rel (%p176) target = $region16
      $region15: #{channel_attention.1} parent=11 // pred_region
        _
      $region16: #{channel_attention.1} parent=11 // pred_fallthru
        _
      // Predicated region
      $region17: #{channel_attention.1} parent=11 // pred_check
        %p179 = pneg %p93
      $region18: #{channel_attention.1} parent=11 // pred_check_branch
        %181 = sbr.rel (%p179) target = $region20
      $region19: #{channel_attention.1} parent=11 // pred_region
        _
      $region20: #{channel_attention.1} parent=11 // pred_fallthru
        _
      // Predicated region
      $region21: #{channel_attention.1} parent=11 // pred_check
        %p182 = pneg %p114
      $region22: #{channel_attention.1} parent=11 // pred_check_branch
        %184 = sbr.rel (%p182) target = $region24
      $region23: #{channel_attention.1} parent=11 // pred_region
        _
      $region24: #{channel_attention.1} parent=11 // pred_fallthru
        _
      // Predicated region
      $region25: #{channel_attention.1} parent=11 // pred_check
        %p185 = pneg %p135
      $region26: #{channel_attention.1} parent=11 // pred_check_branch
        %187 = sbr.rel (%p185) target = $region28
      $region27: #{channel_attention.1} parent=11 // pred_region
        _
      $region28: #{channel_attention.1} parent=11 // pred_fallthru
        _
    $region12: #{channel_attention.1} parent=5 // pred_fallthru
      _
    %p188 = scmp.lt.s32.totalorder %s11, 2
    // Predicated region
    $region29: #{channel_attention.1} parent=5 // pred_check
      %p189 = pneg %p188
    $region30: #{channel_attention.1} parent=5 // pred_check_branch
      %191 = sbr.rel (%p189) target = $region32
    $region31: #{channel_attention.1} parent=5 // pred_region
      // Predicated region
      $region33: #{channel_attention.1} parent=31 // pred_check
        %p192 = pneg %p45
      $region34: #{channel_attention.1} parent=31 // pred_check_branch
        %194 = sbr.rel (%p192) target = $region36
      $region35: #{channel_attention.1} parent=31 // pred_region
        %s195 = smul.u32 2, %s19
        %p196 = scmp.lt.s32.totalorder %s18, 1
        %s197 = scalar_select %p196, %s18, 1
        %p198 = scmp.lt.s32.totalorder %s195, 1
        %s199 = scalar_select %p198, %s195, 1
        %s200 = smul.addr %s197, 16
        %s201 = sadd.s32 %s199, %s200
        %s202 = smul.addr %s201, 8
        %s203 = scalar_lea.vmem %s0, %s202
        %s204 = smul.u32 2, %s19
      $region36: #{channel_attention.1} parent=31 // pred_fallthru
        _
    $region32: #{channel_attention.1} parent=5 // pred_fallthru
      _
    %p205 = scmp.le.s32.totalorder 1, %s11
    %p206 = scmp.lt.s32.totalorder %s11, 3
    %p207 = pnand %p205, %p206
    %p208 = pneg %p207
    // Predicated region
    $region37: #{channel_attention.1} parent=5 // pred_check
      _
    $region38: #{channel_attention.1} parent=5 // pred_check_branch
      %210 = sbr.rel (%p207) target = $region40
    $region39: #{channel_attention.1} parent=5 // pred_region
      %s211 = ssub.s32 %s11, 1
      %s212 = smul.u32 2, %s21
      %p213 = scmp.lt.s32.totalorder %s20, 1
      %s214 = scalar_select %p213, %s20, 1
      %p215 = scmp.lt.s32.totalorder %s212, 1
      %s216 = scalar_select %p215, %s212, 1
      %s217 = smul.addr %s214, 16
      %s218 = sadd.s32 %s216, %s217
      %s219 = smul.addr %s218, 8
      %s220 = scalar_lea.vmem %s0, %s219
      %p221 = pneg %p51
      %p222 = pneg %p48
      %p223 = pneg %p72
      %p224 = pneg %p69
      %p225 = pneg %p93
      %p226 = pneg %p90
      %p227 = pneg %p114
      %p228 = pneg %p111
      %p229 = pneg %p135
      %p230 = pneg %p132
      %p231 = pneg %p161
      %p232 = pneg %p158
      %p233 = scmp.lt.s32.totalorder %s20, 1
      %s234 = scalar_select %p233, %s20, 1
      %s235 = smul.addr %s234, 8
      %s236 = smul.addr %s235, 8
      %s237 = scalar_lea.vmem %s5, %s236
      %s238 = smul.u32 2, %s21
      %p239 = scmp.lt.s32.totalorder %s20, 1
      %s240 = scalar_select %p239, %s20, 1
      %p241 = scmp.lt.s32.totalorder %s238, 1
      %s242 = scalar_select %p241, %s238, 1
      %s243 = smul.addr %s240, 16
      %s244 = sadd.s32 %s242, %s243
      %s245 = smul.addr %s244, 8
      %s246 = scalar_lea.vmem %s0, %s245
      %s247 = smul.u32 2, %s21
      %p248 = scmp.lt.s32.totalorder %s20, 1
      %s249 = scalar_select %p248, %s20, 1
      %s250 = smul.addr %s249, 8
      %s251 = smul.addr %s250, 8
      %s252 = scalar_lea.vmem %s5, %s251
      %p253 = scmp.eq.s32.totalorder %s21, 0
      // Predicated region
      $region41: #{channel_attention.1} parent=39 // pred_check
        %p254 = pneg %p253
      $region42: #{channel_attention.1} parent=39 // pred_check_branch
        %256 = sbr.rel (%p254) target = $region44
      $region43: #{channel_attention.1} parent=39 // pred_region
        %vm257 = vcmask 7168
        %258 = vst.msk [vmem:[#allocation2] sm:$0xff] %vm257, 0.0
        %259 = vst.msk [vmem:[#allocation2 + $0x8] sm:$0xff] %vm257, 0.0
        %260 = vst.msk [vmem:[#allocation2 + $0x10] sm:$0xff] %vm257, 0.0
        %261 = vst.msk [vmem:[#allocation2 + $0x18] sm:$0xff] %vm257, 0.0
        %262 = vst.msk [vmem:[#allocation2 + $0x20] sm:$0xff] %vm257, 0.0
        %263 = vst.msk [vmem:[#allocation2 + $0x28] sm:$0xff] %vm257, 0.0
        %264 = vst.msk [vmem:[#allocation2 + $0x30] sm:$0xff] %vm257, 0.0
        %265 = vst.msk [vmem:[#allocation2 + $0x38] sm:$0xff] %vm257, 0.0
        %266 = vst.msk [vmem:[#allocation3] sm:$0xff] %vm257, -inf
        %267 = vst.msk [vmem:[#allocation3 + $0x8] sm:$0xff] %vm257, -inf
        %268 = vst.msk [vmem:[#allocation3 + $0x10] sm:$0xff] %vm257, -inf
        %269 = vst.msk [vmem:[#allocation3 + $0x18] sm:$0xff] %vm257, -inf
        %270 = vst.msk [vmem:[#allocation3 + $0x20] sm:$0xff] %vm257, -inf
        %271 = vst.msk [vmem:[#allocation3 + $0x28] sm:$0xff] %vm257, -inf
        %272 = vst.msk [vmem:[#allocation3 + $0x30] sm:$0xff] %vm257, -inf
        %273 = vst.msk [vmem:[#allocation3 + $0x38] sm:$0xff] %vm257, -inf
      $region44: #{channel_attention.1} parent=39 // pred_fallthru
        _
      %v274 = vld [vmem:[%s246] sm:$0xff]
      %v275 = vld [vmem:[%s246 + $0x8] sm:$0xff]
      %v276 = vld [vmem:[%s246 + $0x10] sm:$0xff]
      %v277 = vld [vmem:[%s246 + $0x18] sm:$0xff]
      %v278 = vld [vmem:[%s246 + $0x20] sm:$0xff]
      %v279 = vld [vmem:[%s246 + $0x28] sm:$0xff]
      %v280 = vld [vmem:[%s246 + $0x30] sm:$0xff]
      %v281 = vld [vmem:[%s246 + $0x38] sm:$0xff]
      %v282 = vld [vmem:[%s246 + $0x40] sm:$0xff]
      %v283 = vld [vmem:[%s246 + $0x48] sm:$0xff]
      %v284 = vld [vmem:[%s246 + $0x50] sm:$0xff]
      %v285 = vld [vmem:[%s246 + $0x58] sm:$0xff]
      %v286 = vld [vmem:[%s246 + $0x60] sm:$0xff]
      %v287 = vld [vmem:[%s246 + $0x68] sm:$0xff]
      %v288 = vld [vmem:[%s246 + $0x70] sm:$0xff]
      %v289 = vld [vmem:[%s246 + $0x78] sm:$0xff]
      %v290 = vld [vmem:[#allocation2] sm:$0xff]
      %v291 = vld [vmem:[#allocation2 + $0x8] sm:$0xff]
      %v292 = vld [vmem:[#allocation2 + $0x10] sm:$0xff]
      %v293 = vld [vmem:[#allocation2 + $0x18] sm:$0xff]
      %v294 = vld [vmem:[#allocation2 + $0x20] sm:$0xff]
      %v295 = vld [vmem:[#allocation2 + $0x28] sm:$0xff]
      %v296 = vld [vmem:[#allocation2 + $0x30] sm:$0xff]
      %v297 = vld [vmem:[#allocation2 + $0x38] sm:$0xff]
      %v298 = vadd.f32 %v274, %v275
      %299 = vadd.xlane.f32.xlu0 %v298
      %v300 = vpop.xlane.xlu0 %299
      %v301 = vadd.f32 %v276, %v277
      %302 = vadd.xlane.f32.xlu0 %v301
      %v303 = vpop.xlane.xlu0 %302
      %v304 = vadd.f32 %v278, %v279
      %305 = vadd.xlane.f32.xlu0 %v304
      %v306 = vpop.xlane.xlu0 %305
      %v307 = vadd.f32 %v280, %v281
      %308 = vadd.xlane.f32.xlu0 %v307
      %v309 = vpop.xlane.xlu0 %308
      %v310 = vadd.f32 %v282, %v283
      %311 = vadd.xlane.f32.xlu0 %v310
      %v312 = vpop.xlane.xlu0 %311
      %v313 = vadd.f32 %v284, %v285
      %314 = vadd.xlane.f32.xlu0 %v313
      %v315 = vpop.xlane.xlu0 %314
      %v316 = vadd.f32 %v286, %v287
      %317 = vadd.xlane.f32.xlu0 %v316
      %v318 = vpop.xlane.xlu0 %317
      %v319 = vadd.f32 %v288, %v289
      %320 = vadd.xlane.f32.xlu0 %v319
      %v321 = vpop.xlane.xlu0 %320
      %v322 = vadd.f32 %v290, %v300
      %v323 = vadd.f32 %v291, %v303
      %v324 = vadd.f32 %v292, %v306
      %v325 = vadd.f32 %v293, %v309
      %v326 = vadd.f32 %v294, %v312
      %v327 = vadd.f32 %v295, %v315
      %v328 = vadd.f32 %v296, %v318
      %v329 = vadd.f32 %v297, %v321
      %vm330 = vcmask 7168
      %331 = vst.msk [vmem:[#allocation2] sm:$0xff] %vm330, %v322
      %332 = vst.msk [vmem:[#allocation2 + $0x8] sm:$0xff] %vm330, %v323
      %333 = vst.msk [vmem:[#allocation2 + $0x10] sm:$0xff] %vm330, %v324
      %334 = vst.msk [vmem:[#allocation2 + $0x18] sm:$0xff] %vm330, %v325
      %335 = vst.msk [vmem:[#allocation2 + $0x20] sm:$0xff] %vm330, %v326
      %336 = vst.msk [vmem:[#allocation2 + $0x28] sm:$0xff] %vm330, %v327
      %337 = vst.msk [vmem:[#allocation2 + $0x30] sm:$0xff] %vm330, %v328
      %338 = vst.msk [vmem:[#allocation2 + $0x38] sm:$0xff] %vm330, %v329
      %v339 = vmax.f32 %v274, %v275
      %340 = vmax.xlane.f32.xlu0 %v339
      %v341 = vpop.xlane.xlu0 %340
      %v342 = vmax.f32 %v276, %v277
      %343 = vmax.xlane.f32.xlu0 %v342
      %v344 = vpop.xlane.xlu0 %343
      %v345 = vmax.f32 %v278, %v279
      %346 = vmax.xlane.f32.xlu0 %v345
      %v347 = vpop.xlane.xlu0 %346
      %v348 = vmax.f32 %v280, %v281
      %349 = vmax.xlane.f32.xlu0 %v348
      %v350 = vpop.xlane.xlu0 %349
      %v351 = vmax.f32 %v282, %v283
      %352 = vmax.xlane.f32.xlu0 %v351
      %v353 = vpop.xlane.xlu0 %352
      %v354 = vmax.f32 %v284, %v285
      %355 = vmax.xlane.f32.xlu0 %v354
      %v356 = vpop.xlane.xlu0 %355
      %v357 = vmax.f32 %v286, %v287
      %358 = vmax.xlane.f32.xlu0 %v357
      %v359 = vpop.xlane.xlu0 %358
      %v360 = vmax.f32 %v288, %v289
      %361 = vmax.xlane.f32.xlu0 %v360
      %v362 = vpop.xlane.xlu0 %361
      %v363 = vld [vmem:[#allocation3] sm:$0xff]
      %v364 = vld [vmem:[#allocation3 + $0x8] sm:$0xff]
      %v365 = vld [vmem:[#allocation3 + $0x10] sm:$0xff]
      %v366 = vld [vmem:[#allocation3 + $0x18] sm:$0xff]
      %v367 = vld [vmem:[#allocation3 + $0x20] sm:$0xff]
      %v368 = vld [vmem:[#allocation3 + $0x28] sm:$0xff]
      %v369 = vld [vmem:[#allocation3 + $0x30] sm:$0xff]
      %v370 = vld [vmem:[#allocation3 + $0x38] sm:$0xff]
      %v371 = vmax.f32 %v363, %v341
      %v372 = vmax.f32 %v364, %v344
      %v373 = vmax.f32 %v365, %v347
      %v374 = vmax.f32 %v366, %v350
      %v375 = vmax.f32 %v367, %v353
      %v376 = vmax.f32 %v368, %v356
      %v377 = vmax.f32 %v369, %v359
      %v378 = vmax.f32 %v370, %v362
      %379 = vst.msk [vmem:[#allocation3] sm:$0xff] %vm330, %v371
      %380 = vst.msk [vmem:[#allocation3 + $0x8] sm:$0xff] %vm330, %v372
      %381 = vst.msk [vmem:[#allocation3 + $0x10] sm:$0xff] %vm330, %v373
      %382 = vst.msk [vmem:[#allocation3 + $0x18] sm:$0xff] %vm330, %v374
      %383 = vst.msk [vmem:[#allocation3 + $0x20] sm:$0xff] %vm330, %v375
      %384 = vst.msk [vmem:[#allocation3 + $0x28] sm:$0xff] %vm330, %v376
      %385 = vst.msk [vmem:[#allocation3 + $0x30] sm:$0xff] %vm330, %v377
      %386 = vst.msk [vmem:[#allocation3 + $0x38] sm:$0xff] %vm330, %v378
      // Predicated region
      $region45: #{channel_attention.1} parent=39 // pred_check
        %p387 = pneg %p253
      $region46: #{channel_attention.1} parent=39 // pred_check_branch
        %389 = sbr.rel (%p387) target = $region48
      $region47: #{channel_attention.1} parent=39 // pred_region
        %v390 = vld [vmem:[#allocation2] sm:$0xff]
        %v391 = vld [vmem:[#allocation2 + $0x8] sm:$0xff]
        %v392 = vld [vmem:[#allocation2 + $0x10] sm:$0xff]
        %v393 = vld [vmem:[#allocation2 + $0x18] sm:$0xff]
        %v394 = vld [vmem:[#allocation2 + $0x20] sm:$0xff]
        %v395 = vld [vmem:[#allocation2 + $0x28] sm:$0xff]
        %v396 = vld [vmem:[#allocation2 + $0x30] sm:$0xff]
        %v397 = vld [vmem:[#allocation2 + $0x38] sm:$0xff]
        %v398 = vmul.f32 %v390, 0.00390625
        %v399 = vmul.f32 %v391, 0.00390625
        %v400 = vmul.f32 %v392, 0.00390625
        %v401 = vmul.f32 %v393, 0.00390625
        %v402 = vmul.f32 %v394, 0.00390625
        %v403 = vmul.f32 %v395, 0.00390625
        %v404 = vmul.f32 %v396, 0.00390625
        %v405 = vmul.f32 %v397, 0.00390625
        %v406 = vld [vmem:[#allocation3] sm:$0xff]
        %v407 = vld [vmem:[#allocation3 + $0x8] sm:$0xff]
        %v408 = vld [vmem:[#allocation3 + $0x10] sm:$0xff]
        %v409 = vld [vmem:[#allocation3 + $0x18] sm:$0xff]
        %v410 = vld [vmem:[#allocation3 + $0x20] sm:$0xff]
        %v411 = vld [vmem:[#allocation3 + $0x28] sm:$0xff]
        %v412 = vld [vmem:[#allocation3 + $0x30] sm:$0xff]
        %v413 = vld [vmem:[#allocation3 + $0x38] sm:$0xff]
        %422 = vrot.lane.b32.xlu0 %v406, 1
        %v423 = vpop.permute.xlu0 %422
        %424 = vrot.lane.b32.xlu0 %v407, 1
        %v425 = vpop.permute.xlu0 %424
        %426 = vrot.lane.b32.xlu0 %v408, 1
        %v427 = vpop.permute.xlu0 %426
        %428 = vrot.lane.b32.xlu0 %v409, 1
        %v429 = vpop.permute.xlu0 %428
        %430 = vrot.lane.b32.xlu0 %v410, 1
        %v431 = vpop.permute.xlu0 %430
        %432 = vrot.lane.b32.xlu0 %v411, 1
        %v433 = vpop.permute.xlu0 %432
        %434 = vrot.lane.b32.xlu0 %v412, 1
        %v435 = vpop.permute.xlu0 %434
        %436 = vrot.lane.b32.xlu0 %v413, 1
        %v437 = vpop.permute.xlu0 %436
        %v446 = vsel %vm330, %v398, %v423
        %v447 = vsel %vm330, %v399, %v425
        %v448 = vsel %vm330, %v400, %v427
        %v449 = vsel %vm330, %v401, %v429
        %v450 = vsel %vm330, %v402, %v431
        %v451 = vsel %vm330, %v403, %v433
        %v452 = vsel %vm330, %v404, %v435
        %v453 = vsel %vm330, %v405, %v437
        %v454 = vld [vmem:[%s1] sm:$0xf]
        %v455 = vld [vmem:[%s2] sm:$0xf]
        %v456 = vld [vmem:[%s3] sm:$0xff]
        %v457 = vld [vmem:[%s3 + $0x8] sm:$0xff]
        %v458 = vld [vmem:[%s3 + $0x10] sm:$0xff]
        %v459 = vld [vmem:[%s3 + $0x18] sm:$0xff]
        %v460 = vld [vmem:[%s3 + $0x20] sm:$0xff]
        %v461 = vld [vmem:[%s3 + $0x28] sm:$0xff]
        %v462 = vld [vmem:[%s3 + $0x30] sm:$0xff]
        %v463 = vld [vmem:[%s3 + $0x38] sm:$0xff]
        %v464 = vld [vmem:[%s4] sm:$0xff]
        %v465 = vld [vmem:[%s4 + $0x8] sm:$0xff]
        %v466 = vld [vmem:[%s4 + $0x10] sm:$0xff]
        %v467 = vld [vmem:[%s4 + $0x18] sm:$0xff]
        %v468 = vld [vmem:[%s4 + $0x20] sm:$0xff]
        %v469 = vld [vmem:[%s4 + $0x28] sm:$0xff]
        %v470 = vld [vmem:[%s4 + $0x30] sm:$0xff]
        %v471 = vld [vmem:[%s4 + $0x38] sm:$0xff]
        %473 = vset.pattern.permute.xlu0 0
        %474 = vperm.xlu0 %473, %v455
        %v475 = vpop.permute.xlu0 %474
        %vm477 = vcmask 523264
        %v479 = vsel %vm477, %v454, 0
        %481 = vmatprep.subr.mxu0 0.0
        %482 = vmatpush1.msra.mxu0 %v446
        %483 = vmatprep.subr.mxu0 0.0
        %484 = vmatpush1.msra.mxu0 %v447
        %485 = vmatprep.subr.mxu0 0.0
        %486 = vmatpush1.msra.mxu0 %v448
        %487 = vmatprep.subr.mxu0 0.0
        %488 = vmatpush1.msra.mxu0 %v449
        %489 = vmatprep.subr.mxu0 0.0
        %490 = vmatpush1.msra.mxu0 %v450
        %491 = vmatprep.subr.mxu0 0.0
        %492 = vmatpush1.msra.mxu0 %v451
        %493 = vmatprep.subr.mxu0 0.0
        %494 = vmatpush1.msra.mxu0 %v452
        %495 = vmatprep.subr.mxu0 0.0
        %496 = vmatpush1.msra.mxu0 %v453
        %497 = vmatprep.subr.mxu0 0.0
        %498 = vmatpush1.msra.mxu0 0.0
        %499 = vmatprep.subr.mxu0 0.0
        %500 = vmatpush1.msra.mxu0 0.0
        %501 = vmatprep.subr.mxu0 0.0
        %502 = vmatpush1.msra.mxu0 0.0
        %503 = vmatprep.subr.mxu0 0.0
        %504 = vmatpush1.msra.mxu0 0.0
        %505 = vmatprep.subr.mxu0 0.0
        %506 = vmatpush1.msra.mxu0 0.0
        %507 = vmatprep.subr.mxu0 0.0
        %508 = vmatpush1.msra.mxu0 0.0
        %509 = vmatprep.subr.mxu0 0.0
        %510 = vmatpush1.msra.mxu0 0.0
        %511 = vmatprep.subr.mxu0 0.0
        %512 = vmatpush1.msra.mxu0 0.0
        %513 = vmatprep.subr.mxu0 0.0
        %514 = vmatpush1.msra.mxu0 0.0
        %515 = vmatprep.subr.mxu0 0.0
        %516 = vmatpush1.msra.mxu0 0.0
        %517 = vmatprep.subr.mxu0 0.0
        %518 = vmatpush1.msra.mxu0 0.0
        %519 = vmatprep.subr.mxu0 0.0
        %520 = vmatpush1.msra.mxu0 0.0
        %521 = vmatprep.subr.mxu0 0.0
        %522 = vmatpush1.msra.mxu0 0.0
        %523 = vmatprep.subr.mxu0 0.0
        %524 = vmatpush1.msra.mxu0 0.0
        %525 = vmatprep.subr.mxu0 0.0
        %526 = vmatpush1.msra.mxu0 0.0
        %527 = vmatprep.subr.mxu0 0.0
        %528 = vmatpush1.msra.mxu0 0.0
        %529 = vmatprep.subr.mxu0 0.0
        %530 = vmatpush1.msra.mxu0 0.0
        %531 = vmatprep.subr.mxu0 0.0
        %532 = vmatpush1.msra.mxu0 0.0
        %533 = vmatprep.subr.mxu0 0.0
        %534 = vmatpush1.msra.mxu0 0.0
        %535 = vmatprep.subr.mxu0 0.0
        %536 = vmatpush1.msra.mxu0 0.0
        %537 = vmatprep.subr.mxu0 0.0
        %538 = vmatpush1.msra.mxu0 0.0
        %539 = vmatprep.subr.mxu0 0.0
        %540 = vmatpush1.msra.mxu0 0.0
        %541 = vmatprep.subr.mxu0 0.0
        %542 = vmatpush1.msra.mxu0 0.0
        %543 = vmatprep.subr.mxu0 0.0
        %544 = vmatpush1.msra.mxu0 0.0
        %545 = vmatprep.mubr.f32.mxu0 0.0
        %546 = vmatmul.mubr.f32.gmra.mrb[0].mxu0 %v479
        %v547 = vpop.f32.mrb[0].mxu0
        %v548 = vadd.f32 %v475, %v547
        %v549 = vpop.f32.mrb[0].mxu0
        %550 = vdwg.mxu0
        %v551 = vmax.f32 %v548, 0.0
        %553 = vset.pattern.permute.xlu0 0
        %554 = vperm.xlu0 %553, %v464
        %v555 = vpop.permute.xlu0 %554
        %558 = vset.pattern.permute.xlu0 0
        %559 = vperm.xlu0 %558, %v465
        %v560 = vpop.permute.xlu0 %559
        %563 = vset.pattern.permute.xlu0 0
        %564 = vperm.xlu0 %563, %v466
        %v565 = vpop.permute.xlu0 %564
        %568 = vset.pattern.permute.xlu0 0
        %569 = vperm.xlu0 %568, %v467
        %v570 = vpop.permute.xlu0 %569
        %573 = vset.pattern.permute.xlu0 0
        %574 = vperm.xlu0 %573, %v468
        %v575 = vpop.permute.xlu0 %574
        %578 = vset.pattern.permute.xlu0 0
        %579 = vperm.xlu0 %578, %v469
        %v580 = vpop.permute.xlu0 %579
        %583 = vset.pattern.permute.xlu0 0
        %584 = vperm.xlu0 %583, %v470
        %v585 = vpop.permute.xlu0 %584
        %588 = vset.pattern.permute.xlu0 0
        %589 = vperm.xlu0 %588, %v471
        %v590 = vpop.permute.xlu0 %589
        %vm592 = vcmask 31744
        %v594 = vsel %vm592, %v456, 0
        %v597 = vsel %vm592, %v457, 0
        %v600 = vsel %vm592, %v458, 0
        %v603 = vsel %vm592, %v459, 0
        %v606 = vsel %vm592, %v460, 0
        %v609 = vsel %vm592, %v461, 0
        %v612 = vsel %vm592, %v462, 0
        %v615 = vsel %vm592, %v463, 0
        %vm617 = vcmask 1043456
        %v619 = vsel %vm617, %v551, 0
        %621 = vmatprep.subr.mxu0 0.0
        %622 = vmatpush1.msra.mxu0 %v619
        %623 = vmatprep.subr.mxu0 0.0
        %624 = vmatpush1.msra.mxu0 0.0
        %625 = vmatprep.subr.mxu0 0.0
        %626 = vmatpush1.msra.mxu0 0.0
        %627 = vmatprep.subr.mxu0 0.0
        %628 = vmatpush1.msra.mxu0 0.0
        %629 = vmatprep.subr.mxu0 0.0
        %630 = vmatpush1.msra.mxu0 0.0
        %631 = vmatprep.subr.mxu0 0.0
        %632 = vmatpush1.msra.mxu0 0.0
        %633 = vmatprep.subr.mxu0 0.0
        %634 = vmatpush1.msra.mxu0 0.0
        %635 = vmatprep.subr.mxu0 0.0
        %636 = vmatpush1.msra.mxu0 0.0
        %637 = vmatprep.subr.mxu0 0.0
        %638 = vmatpush1.msra.mxu0 0.0
        %639 = vmatprep.subr.mxu0 0.0
        %640 = vmatpush1.msra.mxu0 0.0
        %641 = vmatprep.subr.mxu0 0.0
        %642 = vmatpush1.msra.mxu0 0.0
        %643 = vmatprep.subr.mxu0 0.0
        %644 = vmatpush1.msra.mxu0 0.0
        %645 = vmatprep.subr.mxu0 0.0
        %646 = vmatpush1.msra.mxu0 0.0
        %647 = vmatprep.subr.mxu0 0.0
        %648 = vmatpush1.msra.mxu0 0.0
        %649 = vmatprep.subr.mxu0 0.0
        %650 = vmatpush1.msra.mxu0 0.0
        %651 = vmatprep.subr.mxu0 0.0
        %652 = vmatpush1.msra.mxu0 0.0
        %653 = vmatprep.subr.mxu0 0.0
        %654 = vmatpush1.msra.mxu0 0.0
        %655 = vmatprep.subr.mxu0 0.0
        %656 = vmatpush1.msra.mxu0 0.0
        %657 = vmatprep.subr.mxu0 0.0
        %658 = vmatpush1.msra.mxu0 0.0
        %659 = vmatprep.subr.mxu0 0.0
        %660 = vmatpush1.msra.mxu0 0.0
        %661 = vmatprep.subr.mxu0 0.0
        %662 = vmatpush1.msra.mxu0 0.0
        %663 = vmatprep.subr.mxu0 0.0
        %664 = vmatpush1.msra.mxu0 0.0
        %665 = vmatprep.subr.mxu0 0.0
        %666 = vmatpush1.msra.mxu0 0.0
        %667 = vmatprep.subr.mxu0 0.0
        %668 = vmatpush1.msra.mxu0 0.0
        %669 = vmatprep.subr.mxu0 0.0
        %670 = vmatpush1.msra.mxu0 0.0
        %671 = vmatprep.subr.mxu0 0.0
        %672 = vmatpush1.msra.mxu0 0.0
        %673 = vmatprep.subr.mxu0 0.0
        %674 = vmatpush1.msra.mxu0 0.0
        %675 = vmatprep.subr.mxu0 0.0
        %676 = vmatpush1.msra.mxu0 0.0
        %677 = vmatprep.subr.mxu0 0.0
        %678 = vmatpush1.msra.mxu0 0.0
        %679 = vmatprep.subr.mxu0 0.0
        %680 = vmatpush1.msra.mxu0 0.0
        %681 = vmatprep.subr.mxu0 0.0
        %682 = vmatpush1.msra.mxu0 0.0
        %683 = vmatprep.subr.mxu0 0.0
        %684 = vmatpush1.msra.mxu0 0.0
        %685 = vmatprep.mubr.f32.mxu0 0.0
        %686 = vmatmul.mubr.f32.gmra.mrb[0].mxu0 %v594
        %v687 = vpop.f32.mrb[0].mxu0
        %v688 = vadd.f32 %v555, %v687
        %v689 = vpop.f32.mrb[0].mxu0
        %690 = vmatprep.mubr.f32.mxu0 0.0
        %691 = vmatmul.mubr.f32.gmra.mrb[0].mxu0 %v597
        %v692 = vpop.f32.mrb[0].mxu0
        %v693 = vadd.f32 %v560, %v692
        %v694 = vpop.f32.mrb[0].mxu0
        %695 = vmatprep.mubr.f32.mxu0 0.0
        %696 = vmatmul.mubr.f32.gmra.mrb[0].mxu0 %v600
        %v697 = vpop.f32.mrb[0].mxu0
        %v698 = vadd.f32 %v565, %v697
        %v699 = vpop.f32.mrb[0].mxu0
        %700 = vmatprep.mubr.f32.mxu0 0.0
        %701 = vmatmul.mubr.f32.gmra.mrb[0].mxu0 %v603
        %v702 = vpop.f32.mrb[0].mxu0
        %v703 = vadd.f32 %v570, %v702
        %v704 = vpop.f32.mrb[0].mxu0
        %705 = vmatprep.mubr.f32.mxu0 0.0
        %706 = vmatmul.mubr.f32.gmra.mrb[0].mxu0 %v606
        %v707 = vpop.f32.mrb[0].mxu0
        %v708 = vadd.f32 %v575, %v707
        %v709 = vpop.f32.mrb[0].mxu0
        %710 = vmatprep.mubr.f32.mxu0 0.0
        %711 = vmatmul.mubr.f32.gmra.mrb[0].mxu0 %v609
        %v712 = vpop.f32.mrb[0].mxu0
        %v713 = vadd.f32 %v580, %v712
        %v714 = vpop.f32.mrb[0].mxu0
        %715 = vmatprep.mubr.f32.mxu0 0.0
        %716 = vmatmul.mubr.f32.gmra.mrb[0].mxu0 %v612
        %v717 = vpop.f32.mrb[0].mxu0
        %v718 = vadd.f32 %v585, %v717
        %v719 = vpop.f32.mrb[0].mxu0
        %720 = vmatprep.mubr.f32.mxu0 0.0
        %721 = vmatmul.mubr.f32.gmra.mrb[0].mxu0 %v615
        %v722 = vpop.f32.mrb[0].mxu0
        %v723 = vadd.f32 %v590, %v722
        %v724 = vpop.f32.mrb[0].mxu0
        %725 = vdwg.mxu0
        %734 = vrot.lane.b32.xlu0 %v688, 127
        %v735 = vpop.permute.xlu0 %734
        %736 = vrot.lane.b32.xlu0 %v693, 127
        %v737 = vpop.permute.xlu0 %736
        %738 = vrot.lane.b32.xlu0 %v698, 127
        %v739 = vpop.permute.xlu0 %738
        %740 = vrot.lane.b32.xlu0 %v703, 127
        %v741 = vpop.permute.xlu0 %740
        %742 = vrot.lane.b32.xlu0 %v708, 127
        %v743 = vpop.permute.xlu0 %742
        %744 = vrot.lane.b32.xlu0 %v713, 127
        %v745 = vpop.permute.xlu0 %744
        %746 = vrot.lane.b32.xlu0 %v718, 127
        %v747 = vpop.permute.xlu0 %746
        %748 = vrot.lane.b32.xlu0 %v723, 127
        %v749 = vpop.permute.xlu0 %748
        %v758 = vadd.f32 %v688, %v735
        %v759 = vadd.f32 %v693, %v737
        %v760 = vadd.f32 %v698, %v739
        %v761 = vadd.f32 %v703, %v741
        %v762 = vadd.f32 %v708, %v743
        %v763 = vadd.f32 %v713, %v745
        %v764 = vadd.f32 %v718, %v747
        %v765 = vadd.f32 %v723, %v749
        %v766 = vxor.u32 %v758, 2147483648
        %v767 = vxor.u32 %v759, 2147483648
        %v768 = vxor.u32 %v760, 2147483648
        %v769 = vxor.u32 %v761, 2147483648
        %v770 = vxor.u32 %v762, 2147483648
        %v771 = vxor.u32 %v763, 2147483648
        %v772 = vxor.u32 %v764, 2147483648
        %v773 = vxor.u32 %v765, 2147483648
        %v774 = vmul.f32 %v766, 1.442695
        %v775 = vpow.pop %v774
        %v776 = vmul.f32 %v767, 1.442695
        %v777 = vpow.pop %v776
        %v778 = vmul.f32 %v768, 1.442695
        %v779 = vpow.pop %v778
        %v780 = vmul.f32 %v769, 1.442695
        %v781 = vpow.pop %v780
        %v782 = vmul.f32 %v770, 1.442695
        %v783 = vpow.pop %v782
        %v784 = vmul.f32 %v771, 1.442695
        %v785 = vpow.pop %v784
        %v786 = vmul.f32 %v772, 1.442695
        %v787 = vpow.pop %v786
        %v788 = vmul.f32 %v773, 1.442695
        %v789 = vpow.pop %v788
        %v790 = vadd.f32 %v775, 1.0
        %v791 = vadd.f32 %v777, 1.0
        %v792 = vadd.f32 %v779, 1.0
        %v793 = vadd.f32 %v781, 1.0
        %v794 = vadd.f32 %v783, 1.0
        %v795 = vadd.f32 %v785, 1.0
        %v796 = vadd.f32 %v787, 1.0
        %v797 = vadd.f32 %v789, 1.0
        %v798 = vrcp.pop %v790
        %v799 = vmul.f32 1.0, %v798
        %v800 = vrcp.pop %v791
        %v801 = vmul.f32 1.0, %v800
        %v802 = vrcp.pop %v792
        %v803 = vmul.f32 1.0, %v802
        %v804 = vrcp.pop %v793
        %v805 = vmul.f32 1.0, %v804
        %v806 = vrcp.pop %v794
        %v807 = vmul.f32 1.0, %v806
        %v808 = vrcp.pop %v795
        %v809 = vmul.f32 1.0, %v808
        %v810 = vrcp.pop %v796
        %v811 = vmul.f32 1.0, %v810
        %v812 = vrcp.pop %v797
        %v813 = vmul.f32 1.0, %v812
        %814 = vst.msk [vmem:[%s252] sm:$0xff] %vm330, %v799
        %815 = vst.msk [vmem:[%s252 + $0x8] sm:$0xff] %vm330, %v801
        %816 = vst.msk [vmem:[%s252 + $0x10] sm:$0xff] %vm330, %v803
        %817 = vst.msk [vmem:[%s252 + $0x18] sm:$0xff] %vm330, %v805
        %818 = vst.msk [vmem:[%s252 + $0x20] sm:$0xff] %vm330, %v807
        %819 = vst.msk [vmem:[%s252 + $0x28] sm:$0xff] %vm330, %v809
        %820 = vst.msk [vmem:[%s252 + $0x30] sm:$0xff] %vm330, %v811
        %821 = vst.msk [vmem:[%s252 + $0x38] sm:$0xff] %vm330, %v813
      $region48: #{channel_attention.1} parent=39 // pred_fallthru
        _
      %p822 = scmp.lt.s32.totalorder %s20, 1
      %s823 = scalar_select %p822, %s20, 1
      %s824 = smul.addr %s823, 8
      %s825 = smul.addr %s824, 8
      %s826 = scalar_lea.vmem %s5, %s825
      // Predicated region
      $region49: #{channel_attention.1} parent=39 // pred_check
        %p827 = pneg %p158
      $region50: #{channel_attention.1} parent=39 // pred_check_branch
        %829 = sbr.rel (%p827) target = $region52
      $region51: #{channel_attention.1} parent=39 // pred_region
        _
      $region52: #{channel_attention.1} parent=39 // pred_fallthru
        _
    $region40: #{channel_attention.1} parent=5 // pred_fallthru
      _
    %p830 = scmp.le.s32.totalorder 2, %s11
    // Predicated region
    $region53: #{channel_attention.1} parent=5 // pred_check
      %p831 = pneg %p830
    $region54: #{channel_attention.1} parent=5 // pred_check_branch
      %833 = sbr.rel (%p831) target = $region56
    $region55: #{channel_attention.1} parent=5 // pred_region
      %s834 = ssub.s32 %s11, 2
      // Predicated region
      $region57: #{channel_attention.1} parent=55 // pred_check
        %p835 = pneg %p164
      $region58: #{channel_attention.1} parent=55 // pred_check_branch
        %837 = sbr.rel (%p835) target = $region60
      $region59: #{channel_attention.1} parent=55 // pred_region
        %p838 = scmp.lt.s32.totalorder %s22, 1
        %s839 = scalar_select %p838, %s22, 1
        %s840 = smul.addr %s839, 8
        %s841 = smul.addr %s840, 8
        %s842 = scalar_lea.vmem %s5, %s841
      $region60: #{channel_attention.1} parent=55 // pred_fallthru
        _
    $region56: #{channel_attention.1} parent=5 // pred_fallthru
      _
  $region6: #{channel_attention.1} parent=0 // loop_footer
    %s15 = sadd.s32 1, %s11
  $region7: #{channel_attention.1} parent=0 // loop_footer_branch
    %10 = sbr.rel target = $region3
  $region8: #{channel_attention.1} parent=0 // loop_exit
    _

</llo_original>
